<compile_context>
chip_gen: v7x
topology: tpu7x:2x2x1
jax: 0.10.0
libtpu: 0.0.40
codegen_flags: <defaults>
</compile_context>

<pallas_src>
import jax
import jax.numpy as jnp
import numpy as np
from jax.experimental import pallas as pl
from jax.experimental.pallas import tpu as pltpu


def channel_attention_kernel(xw_ref, wc_ref, bc_ref, w1_ref, b1_ref,
                             w2_ref, b2_ref, o_ref):
    # xw_ref : (TB, taps*P, W)  im2col'd input (taps = reduction**2)
    # wc_ref : (W, F)   1x1-conv weight (in, out);  bc_ref: (1, F) conv bias
    # w1/w2  : (F, F)   linear weights (in, out);   b1/b2 : (1, F)
    # o_ref  : (TB, P, F)
    TB, MP, W = xw_ref.shape
    P = o_ref.shape[1]
    F = o_ref.shape[2]
    taps = MP // P

    # (1) 1x1 conv for every tap of every pooled position as ONE MXU matmul
    #     (review: fold the taps loop; M-dim utilization ~taps x better, no
    #     serialized dot->max->dot chain).
    yc = jnp.dot(xw_ref[...].reshape(TB * MP, W), wc_ref[...],
                 preferred_element_type=jnp.float32)            # (TB*taps*P, F)

    # (2) MaxPool2d(r, r): VPU max over the taps axis.  The conv bias is a
    #     per-feature constant, so it commutes with the max -> add once after.
    y = jnp.max(yc.reshape(TB, taps, P, F), axis=1) + bc_ref[...]   # (TB, P, F)

    # (3) AdaptiveMaxPool2d((1,1)) / AdaptiveAvgPool2d((1,1)) over the pooled
    #     spatial map (sublane reduction per sample).
    z_max = jnp.max(y, axis=1)                                  # (TB, F)
    z_mean = jnp.sum(y, axis=1) * (1.0 / P)                     # (TB, F)

    # (4) the two LazyLinear(F) layers (only their sum feeds the softmax),
    #     softmax over the feature (lane) dim; denominator via EUP approx
    #     reciprocal (review: moves the divide off the VALU).
    logits = (jnp.dot(z_max, w1_ref[...], preferred_element_type=jnp.float32)
              + b1_ref[...]
              + jnp.dot(z_mean, w2_ref[...], preferred_element_type=jnp.float32)
              + b2_ref[...])                                    # (TB, F)
    m = jnp.max(logits, axis=-1, keepdims=True)
    e = jnp.exp(logits - m)
    z = e * pl.reciprocal(jnp.sum(e, axis=-1, keepdims=True), approx=True)

    # (5) channel re-weighting of the pooled map.
    o_ref[...] = y * z[:, None, :]


def channel_attention(x, wc_t, bc, w1_t, b1, w2_t, b2, *, reduction=2,
                      batch_tile=None):
    """x: (B, C, H, W) float32 (PyTorch NCHW).  Returns (B, C//r, H//r, F)."""
    B, C, H, W = x.shape
    NF = wc_t.shape[1]
    r = reduction
    assert C % r == 0 and H % r == 0
    Cp, Hp = C // r, H // r
    P = Cp * Hp
    taps = r * r

    # Batch-tile selection (review: amortize ~0.35us/step grid overhead).
    # Largest divisor of B whose input block stays <= ~2 MiB (safe with double
    # buffering inside v7x's 64 MiB VMEM / 32 MiB default scoped limit) while
    # keeping >= 2 grid steps when B >= 2 so both v7x TensorCores get work.
    if batch_tile is None:
        block_bytes = taps * P * W * 4
        tb = 1
        for d in range(1, B + 1):
            if B % d == 0 and d * block_bytes <= (2 << 20) and (B == 1 or B // d >= 2):
                tb = d
    else:
        tb = batch_tile
    assert B % tb == 0

    # im2col of the r x r max-pool taps -> (B, taps*P, W); row = t*P + p with
    # t = rc*r + rh, p = cp*Hp + hp.  allow_input_fusion below lets XLA fuse
    # this transpose into the pallas_call operand (no separate HBM pass).
    # TODO(synk): for large C*H*W, gather the taps inside the kernel from a
    # plain (TB, C, H, W) block via strided pl.ds loads to drop the copy fully.
    xr = x.reshape(B, Cp, r, Hp, r, W)
    xw = jnp.transpose(xr, (0, 2, 4, 1, 3, 5)).reshape(B, taps * P, W)
    xw = xw.astype(jnp.float32)

    out = pl.pallas_call(
        channel_attention_kernel,
        out_shape=jax.ShapeDtypeStruct((B, P, NF), jnp.float32),
        grid=(B // tb,),
        in_specs=[
            pl.BlockSpec((tb, taps * P, W), lambda b: (b, 0, 0)),
            pl.BlockSpec((W, NF), lambda b: (0, 0)),
            pl.BlockSpec((1, NF), lambda b: (0, 0)),
            pl.BlockSpec((NF, NF), lambda b: (0, 0)),
            pl.BlockSpec((1, NF), lambda b: (0, 0)),
            pl.BlockSpec((NF, NF), lambda b: (0, 0)),
            pl.BlockSpec((1, NF), lambda b: (0, 0)),
        ],
        out_specs=pl.BlockSpec((tb, P, NF), lambda b: (b, 0, 0)),
        compiler_params=pltpu.CompilerParams(
            dimension_semantics=("parallel",),
            allow_input_fusion=[True, False, False, False, False, False, False]),
    )(xw, wc_t, bc.reshape(1, NF), w1_t, b1.reshape(1, NF),
      w2_t, b2.reshape(1, NF))

    return out.reshape(B, Cp, Hp, NF)


def reference(x, wc_t, bc, w1_t, b1, w2_t, b2, *, reduction=2):
    """Plain-JAX replica of the PyTorch forward (for correctness check)."""
    B, C, H, W = x.shape
    NF = wc_t.shape[1]
    r = reduction
    # transpose(-1,-3) + 1x1 conv over W:
    y = jnp.einsum('bchw,wf->bfhc', x, wc_t) + bc.reshape(1, NF, 1, 1)
    # MaxPool2d(r, r) over (h, c)
    yp = y.reshape(B, NF, H // r, r, C // r, r).max(axis=(3, 5))   # (B,F,Hp,Cp)
    z_max = yp.max(axis=(2, 3))                                    # (B, F)
    z_mean = yp.mean(axis=(2, 3))                                  # (B, F)
    z1 = z_max @ w1_t + b1.reshape(1, NF)
    z2 = z_mean @ w2_t + b2.reshape(1, NF)
    z = jax.nn.softmax(z1 + z2, axis=-1)
    y_t = jnp.transpose(yp, (0, 3, 2, 1))                          # (B,Cp,Hp,F)
    return y_t * z[:, None, None, :]


if __name__ == "__main__":
    B, C, H, W = 2, 4, 16, 16
    nb_features, reduction = 8, 2

    key = jax.random.PRNGKey(0)
    ks = jax.random.split(key, 7)
    x = jax.random.normal(ks[0], (B, C, H, W), jnp.float32)

    # Deterministic synthetic parameters (shapes implied by the Lazy modules):
    #   LazyConv2d(nb_features, 1): weight (nb_features, W, 1, 1) stored
    #   transposed (W, nb_features); LazyLinear(nb_features): (F, F) (in, out).
    wc_t = 0.1 * jax.random.normal(ks[1], (W, nb_features), jnp.float32)
    bc = 0.1 * jax.random.normal(ks[2], (nb_features,), jnp.float32)
    w1_t = 0.1 * jax.random.normal(ks[3], (nb_features, nb_features), jnp.float32)
    b1 = 0.1 * jax.random.normal(ks[4], (nb_features,), jnp.float32)
    w2_t = 0.1 * jax.random.normal(ks[5], (nb_features, nb_features), jnp.float32)
    b2 = 0.1 * jax.random.normal(ks[6], (nb_features,), jnp.float32)

    fn = jax.jit(lambda *args: channel_attention(*args, reduction=reduction))
    out = jax.block_until_ready(fn(x, wc_t, bc, w1_t, b1, w2_t, b2))

    ref = reference(x, wc_t, bc, w1_t, b1, w2_t, b2, reduction=reduction)
    np.testing.assert_allclose(np.asarray(out), np.asarray(ref),
                               rtol=2e-3, atol=2e-3)
    print("KERNEL_OK")
</pallas_src>

<mosaic_0001>
module attributes {stable_mosaic.version = 11 : i64} {
  func.func @channel_attention_kernel(%arg0: i32, %arg1: memref<1x64x16xf32, #tpu.memory_space<vmem>>, %arg2: memref<16x8xf32, #tpu.memory_space<vmem>>, %arg3: memref<1x8xf32, #tpu.memory_space<vmem>>, %arg4: memref<8x8xf32, #tpu.memory_space<vmem>>, %arg5: memref<1x8xf32, #tpu.memory_space<vmem>>, %arg6: memref<8x8xf32, #tpu.memory_space<vmem>>, %arg7: memref<1x8xf32, #tpu.memory_space<vmem>>, %arg8: memref<1x16x8xf32, #tpu.memory_space<vmem>>) attributes {dimension_semantics = [#tpu.dimension_semantics<parallel>], iteration_bounds = array<i64: 2>, scalar_prefetch = 0 : i64, scratch_operands = 0 : i64, tpu.core_type = #tpu.core_type<tc>, window_params = [{transform_indices = @transform_0, window_bounds = array<i64: 1, 64, 16>}, {pipeline_mode = #tpu.pipeline_mode<synchronous>, transform_indices = @transform_1, window_bounds = array<i64: 16, 8>}, {pipeline_mode = #tpu.pipeline_mode<synchronous>, transform_indices = @transform_2, window_bounds = array<i64: 1, 8>}, {pipeline_mode = #tpu.pipeline_mode<synchronous>, transform_indices = @transform_3, window_bounds = array<i64: 8, 8>}, {pipeline_mode = #tpu.pipeline_mode<synchronous>, transform_indices = @transform_4, window_bounds = array<i64: 1, 8>}, {pipeline_mode = #tpu.pipeline_mode<synchronous>, transform_indices = @transform_5, window_bounds = array<i64: 8, 8>}, {pipeline_mode = #tpu.pipeline_mode<synchronous>, transform_indices = @transform_6, window_bounds = array<i64: 1, 8>}, {transform_indices = @transform_7, window_bounds = array<i64: 1, 16, 8>}]} {
    %c0 = arith.constant 0 : index
    %c0_0 = arith.constant 0 : index
    %c0_1 = arith.constant 0 : index
    %0 = vector.load %arg1[%c0, %c0_0, %c0_1] : memref<1x64x16xf32, #tpu.memory_space<vmem>>, vector<1x64x16xf32>
    %1 = vector.shape_cast %0 : vector<1x64x16xf32> to vector<64x16xf32>
    %c0_2 = arith.constant 0 : index
    %c0_3 = arith.constant 0 : index
    %2 = vector.load %arg2[%c0_2, %c0_3] : memref<16x8xf32, #tpu.memory_space<vmem>>, vector<16x8xf32>
    %cst = arith.constant dense<0.000000e+00> : vector<64x8xf32>
    %3 = tpu.matmul %1, %2, %cst {dimension_numbers = #tpu.dot_dimension_numbers<[1], [0], [0], [1], [0, 0, 1, 1], [], []>} : vector<64x16xf32>, vector<16x8xf32>, vector<64x8xf32> -> vector<64x8xf32>
    %4 = vector.shape_cast %3 : vector<64x8xf32> to vector<1x4x16x8xf32>
    %cst_4 = arith.constant dense<0xFF800000> : vector<1x16x8xf32>
    %5 = vector.multi_reduction <maximumf>, %4, %cst_4 [1] : vector<1x4x16x8xf32> to vector<1x16x8xf32>
    %c0_5 = arith.constant 0 : index
    %c0_6 = arith.constant 0 : index
    %6 = vector.load %arg3[%c0_5, %c0_6] : memref<1x8xf32, #tpu.memory_space<vmem>>, vector<1x8xf32>
    %7 = vector.shape_cast %6 : vector<1x8xf32> to vector<1x1x8xf32>
    %8 = vector.broadcast %7 : vector<1x1x8xf32> to vector<1x16x8xf32>
    %9 = arith.addf %5, %8 : vector<1x16x8xf32>
    %cst_7 = arith.constant dense<0xFF800000> : vector<1x8xf32>
    %10 = vector.multi_reduction <maximumf>, %9, %cst_7 [1] : vector<1x16x8xf32> to vector<1x8xf32>
    %cst_8 = arith.constant dense<0.000000e+00> : vector<1x8xf32>
    %11 = vector.multi_reduction <add>, %9, %cst_8 [1] : vector<1x16x8xf32> to vector<1x8xf32>
    %cst_9 = arith.constant 6.250000e-02 : f32
    %12 = vector.broadcast %cst_9 : f32 to vector<1x8xf32>
    %13 = arith.mulf %11, %12 : vector<1x8xf32>
    %c0_10 = arith.constant 0 : index
    %c0_11 = arith.constant 0 : index
    %14 = vector.load %arg4[%c0_10, %c0_11] : memref<8x8xf32, #tpu.memory_space<vmem>>, vector<8x8xf32>
    %cst_12 = arith.constant dense<0.000000e+00> : vector<1x8xf32>
    %15 = tpu.matmul %10, %14, %cst_12 {dimension_numbers = #tpu.dot_dimension_numbers<[1], [0], [0], [1], [0, 0, 1, 1], [], []>} : vector<1x8xf32>, vector<8x8xf32>, vector<1x8xf32> -> vector<1x8xf32>
    %c0_13 = arith.constant 0 : index
    %c0_14 = arith.constant 0 : index
    %16 = vector.load %arg5[%c0_13, %c0_14] : memref<1x8xf32, #tpu.memory_space<vmem>>, vector<1x8xf32>
    %17 = arith.addf %15, %16 : vector<1x8xf32>
    %c0_15 = arith.constant 0 : index
    %c0_16 = arith.constant 0 : index
    %18 = vector.load %arg6[%c0_15, %c0_16] : memref<8x8xf32, #tpu.memory_space<vmem>>, vector<8x8xf32>
    %cst_17 = arith.constant dense<0.000000e+00> : vector<1x8xf32>
    %19 = tpu.matmul %13, %18, %cst_17 {dimension_numbers = #tpu.dot_dimension_numbers<[1], [0], [0], [1], [0, 0, 1, 1], [], []>} : vector<1x8xf32>, vector<8x8xf32>, vector<1x8xf32> -> vector<1x8xf32>
    %20 = arith.addf %17, %19 : vector<1x8xf32>
    %c0_18 = arith.constant 0 : index
    %c0_19 = arith.constant 0 : index
    %21 = vector.load %arg7[%c0_18, %c0_19] : memref<1x8xf32, #tpu.memory_space<vmem>>, vector<1x8xf32>
    %22 = arith.addf %20, %21 : vector<1x8xf32>
    %cst_20 = arith.constant dense<0xFF800000> : vector<1xf32>
    %23 = vector.multi_reduction <maximumf>, %22, %cst_20 [1] : vector<1x8xf32> to vector<1xf32>
    %24 = vector.shape_cast %23 : vector<1xf32> to vector<1x1xf32>
    %25 = vector.broadcast %24 : vector<1x1xf32> to vector<1x8xf32>
    %26 = arith.subf %22, %25 : vector<1x8xf32>
    %27 = math.exp %26 : vector<1x8xf32>
    %cst_21 = arith.constant dense<0.000000e+00> : vector<1xf32>
    %28 = vector.multi_reduction <add>, %27, %cst_21 [1] : vector<1x8xf32> to vector<1xf32>
    %29 = vector.shape_cast %28 : vector<1xf32> to vector<1x1xf32>
    %30 = tpu.reciprocal %29 {approx = true} : vector<1x1xf32> -> vector<1x1xf32>
    %31 = vector.broadcast %30 : vector<1x1xf32> to vector<1x8xf32>
    %32 = arith.mulf %27, %31 : vector<1x8xf32>
    %33 = vector.shape_cast %32 : vector<1x8xf32> to vector<1x1x8xf32>
    %34 = vector.broadcast %33 : vector<1x1x8xf32> to vector<1x16x8xf32>
    %35 = arith.mulf %9, %34 : vector<1x16x8xf32>
    %c0_22 = arith.constant 0 : index
    %c0_23 = arith.constant 0 : index
    %c0_24 = arith.constant 0 : index
    %36 = vector.load %arg8[%c0_22, %c0_23, %c0_24] : memref<1x16x8xf32, #tpu.memory_space<vmem>>, vector<1x16x8xf32>
    tpu.vector_store %arg8[%c0_22, %c0_23, %c0_24], %35 {strides = array<i32>} : memref<1x16x8xf32, #tpu.memory_space<vmem>>, vector<1x16x8xf32>,
    return
  }
  func.func @transform_0(%arg0: i32) -> (i32, i32, i32) {
    %c0_i32 = arith.constant 0 : i32
    %c0_i32_0 = arith.constant 0 : i32
    %c0_i32_1 = arith.constant 0 : i32
    return %arg0, %c0_i32, %c0_i32_0 : i32, i32, i32
  }
  func.func @transform_1(%arg0: i32) -> (i32, i32) {
    %c0_i32 = arith.constant 0 : i32
    %c0_i32_0 = arith.constant 0 : i32
    %c0_i32_1 = arith.constant 0 : i32
    return %c0_i32, %c0_i32_0 : i32, i32
  }
  func.func @transform_2(%arg0: i32) -> (i32, i32) {
    %c0_i32 = arith.constant 0 : i32
    %c0_i32_0 = arith.constant 0 : i32
    %c0_i32_1 = arith.constant 0 : i32
    return %c0_i32, %c0_i32_0 : i32, i32
  }
  func.func @transform_3(%arg0: i32) -> (i32, i32) {
    %c0_i32 = arith.constant 0 : i32
    %c0_i32_0 = arith.constant 0 : i32
    %c0_i32_1 = arith.constant 0 : i32
    return %c0_i32, %c0_i32_0 : i32, i32
  }
  func.func @transform_4(%arg0: i32) -> (i32, i32) {
    %c0_i32 = arith.constant 0 : i32
    %c0_i32_0 = arith.constant 0 : i32
    %c0_i32_1 = arith.constant 0 : i32
    return %c0_i32, %c0_i32_0 : i32, i32
  }
  func.func @transform_5(%arg0: i32) -> (i32, i32) {
    %c0_i32 = arith.constant 0 : i32
    %c0_i32_0 = arith.constant 0 : i32
    %c0_i32_1 = arith.constant 0 : i32
    return %c0_i32, %c0_i32_0 : i32, i32
  }
  func.func @transform_6(%arg0: i32) -> (i32, i32) {
    %c0_i32 = arith.constant 0 : i32
    %c0_i32_0 = arith.constant 0 : i32
    %c0_i32_1 = arith.constant 0 : i32
    return %c0_i32, %c0_i32_0 : i32, i32
  }
  func.func @transform_7(%arg0: i32) -> (i32, i32, i32) {
    %c0_i32 = arith.constant 0 : i32
    %c0_i32_0 = arith.constant 0 : i32
    %c0_i32_1 = arith.constant 0 : i32
    return %arg0, %c0_i32, %c0_i32_0 : i32, i32, i32
  }
}

</mosaic_0001>

<llo_original>
// kernel: _lambda_.1
$region0: #{_lambda_.1}
  #allocation0 [shape = 'u32[]', space=smem, size = 0x4, offset = 0x4, fixed_abs, tag = 'smem constant byte address 0x4 - core index']
  #allocation1 [shape = 'u32[144,128]{1,0:T(1,128)}', space=vmem, size = 0x12000, scoped, tag = 'internal scratch']
  %s0 = inlined_call_operand.vmem [shape: f32[2,64,16], index: 0, kind: input, shape index: {}]
  %s1 = inlined_call_operand.vmem [shape: f32[16,8], index: 1, kind: input, shape index: {}]
  %s2 = inlined_call_operand.vmem [shape: f32[1,8], index: 2, kind: input, shape index: {}]
  %s3 = inlined_call_operand.vmem [shape: f32[8,8], index: 3, kind: input, shape index: {}]
  %s4 = inlined_call_operand.vmem [shape: f32[1,8], index: 4, kind: input, shape index: {}]
  %s5 = inlined_call_operand.vmem [shape: f32[8,8], index: 5, kind: input, shape index: {}]
  %s6 = inlined_call_operand.vmem [shape: f32[1,8], index: 6, kind: input, shape index: {}]
  %s7 = inlined_call_operand.hbm [shape: f32[2,16,8], index: 7, kind: output, shape index: {}]
  %s8 = sld [smem:[#allocation0]]
  $region61: #{_lambda_.1} parent=0
    _
  %s10 = ssub.s32 1, %s8
  %s11 = scalar_select 0, %s10, %s8
  $region1: #{_lambda_.1} parent=0
    #allocation2 [shape = 'u8[16384]{0}', space=vmem, size = 0x4000, scoped, tag = 'output window, operand 0']
    #allocation3 [shape = 's32[2]{0}', space=sflag, size = 0x8, scoped, tag = 'scoped memory for _lambda_.1']
    %12 = vsyncpa [#allocation3], 0
    %s13 = scalar_lea.sflag [#allocation3], 1
    %14 = vsyncpa %s13, 0
    loop: start=0, step=1, limit=4
    $region2: #{_lambda_.1} parent=1 // loop_pre_header
      _
    $region3: #{_lambda_.1} parent=1 // loop_header
      %s16 = sphi 0, %s20
      %p17 = scmp.ge.s32.totalorder %s16, 4
      %s26 = sphi 0, %s28
      %s29 = sphi 0, %s26
      %s30 = sphi 0, %s29
      %s46 = sphi 0, %s30
      %s50 = sphi 0, %s50
      %s52 = sphi 0, %s50
      %s53 = sphi 0, %s52
      %s67 = sphi 0, %s53
      %s71 = sphi 0, %s71
      %s73 = sphi 0, %s71
      %s74 = sphi 0, %s73
      %s88 = sphi 0, %s74
      %s92 = sphi 0, %s92
      %s94 = sphi 0, %s92
      %s95 = sphi 0, %s94
      %s109 = sphi 0, %s95
      %s113 = sphi 0, %s113
      %s115 = sphi 0, %s113
      %s116 = sphi 0, %s115
      %s130 = sphi 0, %s116
      %s134 = sphi 0, %s134
      %s136 = sphi 0, %s134
      %s137 = sphi 0, %s136
      %s151 = sphi 0, %s137
      %s155 = sphi 0, %s155
      %s157 = sphi 0, %s155
      %s158 = sphi 0, %s157
      %s172 = sphi 0, %s158
      %s178 = sphi 0, %s180
      %s181 = sphi 0, %s178
      %s182 = sphi 0, %s181
      %s198 = sphi 0, %s182
    $region4: #{_lambda_.1} parent=1 // loop_header_branch
      %19 = sbr.rel (%p17) target = $region8
    $region5: #{_lambda_.1} parent=1 // loop_body
      %s21 = ssub.s32 %s16, 1
      %s22 = ssub.s32 %s16, 2
      %s23 = sadd.s32 %s16, 1
      %s24 = ssub.s32 %s16, %s23
      %p25 = scmp.eq.s32.totalorder %s24, 0
      %s27 = sadd.s32 %s26, 1
      %s28 = scalar_select %p25, %s26, %s27
      %p31 = pneg %p25
      %p32 = scmp.eq.s32.totalorder %s16, 1
      %p33 = por %p31, %p32
      %p34 = scmp.ne.s32.totalorder %s26, %s29
      %p35 = scmp.eq.s32.totalorder %s16, 0
      %p36 = por %p34, %p35
      %p37 = scmp.ne.s32.totalorder %s26, %s29
      %p38 = scmp.eq.s32.totalorder %s21, 1
      %p39 = por %p37, %p38
      %p40 = scmp.ne.s32.totalorder %s29, %s30
      %p41 = scmp.eq.s32.totalorder %s21, 0
      %p42 = por %p40, %p41
      %p43 = scmp.ne.s32.totalorder %s29, %s30
      %p44 = scmp.eq.s32.totalorder %s22, 1
      %p45 = por %p43, %p44
      %p47 = scmp.ne.s32.totalorder %s30, %s46
      %p48 = scmp.eq.s32.totalorder %s22, 0
      %p49 = por %p47, %p48
      %s51 = sadd.s32 %s50, 1
      %p54 = scmp.eq.s32.totalorder %s16, 1
      %p55 = scmp.ne.s32.totalorder %s50, %s52
      %p56 = scmp.eq.s32.totalorder %s16, 0
      %p57 = por %p55, %p56
      %p58 = scmp.ne.s32.totalorder %s50, %s52
      %p59 = scmp.eq.s32.totalorder %s21, 1
      %p60 = por %p58, %p59
      %p61 = scmp.ne.s32.totalorder %s52, %s53
      %p62 = scmp.eq.s32.totalorder %s21, 0
      %p63 = por %p61, %p62
      %p64 = scmp.ne.s32.totalorder %s52, %s53
      %p65 = scmp.eq.s32.totalorder %s22, 1
      %p66 = por %p64, %p65
      %p68 = scmp.ne.s32.totalorder %s53, %s67
      %p69 = scmp.eq.s32.totalorder %s22, 0
      %p70 = por %p68, %p69
      %s72 = sadd.s32 %s71, 1
      %p75 = scmp.eq.s32.totalorder %s16, 1
      %p76 = scmp.ne.s32.totalorder %s71, %s73
      %p77 = scmp.eq.s32.totalorder %s16, 0
      %p78 = por %p76, %p77
      %p79 = scmp.ne.s32.totalorder %s71, %s73
      %p80 = scmp.eq.s32.totalorder %s21, 1
      %p81 = por %p79, %p80
      %p82 = scmp.ne.s32.totalorder %s73, %s74
      %p83 = scmp.eq.s32.totalorder %s21, 0
      %p84 = por %p82, %p83
      %p85 = scmp.ne.s32.totalorder %s73, %s74
      %p86 = scmp.eq.s32.totalorder %s22, 1
      %p87 = por %p85, %p86
      %p89 = scmp.ne.s32.totalorder %s74, %s88
      %p90 = scmp.eq.s32.totalorder %s22, 0
      %p91 = por %p89, %p90
      %s93 = sadd.s32 %s92, 1
      %p96 = scmp.eq.s32.totalorder %s16, 1
      %p97 = scmp.ne.s32.totalorder %s92, %s94
      %p98 = scmp.eq.s32.totalorder %s16, 0
      %p99 = por %p97, %p98
      %p100 = scmp.ne.s32.totalorder %s92, %s94
      %p101 = scmp.eq.s32.totalorder %s21, 1
      %p102 = por %p100, %p101
      %p103 = scmp.ne.s32.totalorder %s94, %s95
      %p104 = scmp.eq.s32.totalorder %s21, 0
      %p105 = por %p103, %p104
      %p106 = scmp.ne.s32.totalorder %s94, %s95
      %p107 = scmp.eq.s32.totalorder %s22, 1
      %p108 = por %p106, %p107
      %p110 = scmp.ne.s32.totalorder %s95, %s109
      %p111 = scmp.eq.s32.totalorder %s22, 0
      %p112 = por %p110, %p111
      %s114 = sadd.s32 %s113, 1
      %p117 = scmp.eq.s32.totalorder %s16, 1
      %p118 = scmp.ne.s32.totalorder %s113, %s115
      %p119 = scmp.eq.s32.totalorder %s16, 0
      %p120 = por %p118, %p119
      %p121 = scmp.ne.s32.totalorder %s113, %s115
      %p122 = scmp.eq.s32.totalorder %s21, 1
      %p123 = por %p121, %p122
      %p124 = scmp.ne.s32.totalorder %s115, %s116
      %p125 = scmp.eq.s32.totalorder %s21, 0
      %p126 = por %p124, %p125
      %p127 = scmp.ne.s32.totalorder %s115, %s116
      %p128 = scmp.eq.s32.totalorder %s22, 1
      %p129 = por %p127, %p128
      %p131 = scmp.ne.s32.totalorder %s116, %s130
      %p132 = scmp.eq.s32.totalorder %s22, 0
      %p133 = por %p131, %p132
      %s135 = sadd.s32 %s134, 1
      %p138 = scmp.eq.s32.totalorder %s16, 1
      %p139 = scmp.ne.s32.totalorder %s134, %s136
      %p140 = scmp.eq.s32.totalorder %s16, 0
      %p141 = por %p139, %p140
      %p142 = scmp.ne.s32.totalorder %s134, %s136
      %p143 = scmp.eq.s32.totalorder %s21, 1
      %p144 = por %p142, %p143
      %p145 = scmp.ne.s32.totalorder %s136, %s137
      %p146 = scmp.eq.s32.totalorder %s21, 0
      %p147 = por %p145, %p146
      %p148 = scmp.ne.s32.totalorder %s136, %s137
      %p149 = scmp.eq.s32.totalorder %s22, 1
      %p150 = por %p148, %p149
      %p152 = scmp.ne.s32.totalorder %s137, %s151
      %p153 = scmp.eq.s32.totalorder %s22, 0
      %p154 = por %p152, %p153
      %s156 = sadd.s32 %s155, 1
      %p159 = scmp.eq.s32.totalorder %s16, 1
      %p160 = scmp.ne.s32.totalorder %s155, %s157
      %p161 = scmp.eq.s32.totalorder %s16, 0
      %p162 = por %p160, %p161
      %p163 = scmp.ne.s32.totalorder %s155, %s157
      %p164 = scmp.eq.s32.totalorder %s21, 1
      %p165 = por %p163, %p164
      %p166 = scmp.ne.s32.totalorder %s157, %s158
      %p167 = scmp.eq.s32.totalorder %s21, 0
      %p168 = por %p166, %p167
      %p169 = scmp.ne.s32.totalorder %s157, %s158
      %p170 = scmp.eq.s32.totalorder %s22, 1
      %p171 = por %p169, %p170
      %p173 = scmp.ne.s32.totalorder %s158, %s172
      %p174 = scmp.eq.s32.totalorder %s22, 0
      %p175 = por %p173, %p174
      %s176 = ssub.s32 %s16, %s23
      %p177 = scmp.eq.s32.totalorder %s176, 0
      %s179 = sadd.s32 %s178, 1
      %s180 = scalar_select %p177, %s178, %s179
      %p183 = pneg %p177
      %p184 = scmp.eq.s32.totalorder %s16, 1
      %p185 = por %p183, %p184
      %p186 = scmp.ne.s32.totalorder %s178, %s181
      %p187 = scmp.eq.s32.totalorder %s16, 0
      %p188 = por %p186, %p187
      %p189 = scmp.ne.s32.totalorder %s178, %s181
      %p190 = scmp.eq.s32.totalorder %s21, 1
      %p191 = por %p189, %p190
      %p192 = scmp.ne.s32.totalorder %s181, %s182
      %p193 = scmp.eq.s32.totalorder %s21, 0
      %p194 = por %p192, %p193
      %p195 = scmp.ne.s32.totalorder %s181, %s182
      %p196 = scmp.eq.s32.totalorder %s22, 1
      %p197 = por %p195, %p196
      %p199 = scmp.ne.s32.totalorder %s182, %s198
      %p200 = scmp.eq.s32.totalorder %s22, 0
      %p201 = por %p199, %p200
      %p202 = scmp.le.s32.totalorder 1, %s16
      %p203 = scmp.lt.s32.totalorder %s16, 3
      %p204 = pnand %p202, %p203
      %p205 = pneg %p204
      // Predicated region
      $region9: #{_lambda_.1} parent=5 // pred_check
        _
      $region10: #{_lambda_.1} parent=5 // pred_check_branch
        %207 = sbr.rel (%p204) target = $region12
      $region11: #{_lambda_.1} parent=5 // pred_region
        %s208 = ssub.s32 %s16, 1
        // Predicated region
        $region13: #{_lambda_.1} parent=11 // pred_check
          %p209 = pneg %p63
        $region14: #{_lambda_.1} parent=11 // pred_check_branch
          %211 = sbr.rel (%p209) target = $region16
        $region15: #{_lambda_.1} parent=11 // pred_region
          _
        $region16: #{_lambda_.1} parent=11 // pred_fallthru
          _
        // Predicated region
        $region17: #{_lambda_.1} parent=11 // pred_check
          %p212 = pneg %p84
        $region18: #{_lambda_.1} parent=11 // pred_check_branch
          %214 = sbr.rel (%p212) target = $region20
        $region19: #{_lambda_.1} parent=11 // pred_region
          _
        $region20: #{_lambda_.1} parent=11 // pred_fallthru
          _
        // Predicated region
        $region21: #{_lambda_.1} parent=11 // pred_check
          %p215 = pneg %p105
        $region22: #{_lambda_.1} parent=11 // pred_check_branch
          %217 = sbr.rel (%p215) target = $region24
        $region23: #{_lambda_.1} parent=11 // pred_region
          _
        $region24: #{_lambda_.1} parent=11 // pred_fallthru
          _
        // Predicated region
        $region25: #{_lambda_.1} parent=11 // pred_check
          %p218 = pneg %p126
        $region26: #{_lambda_.1} parent=11 // pred_check_branch
          %220 = sbr.rel (%p218) target = $region28
        $region27: #{_lambda_.1} parent=11 // pred_region
          _
        $region28: #{_lambda_.1} parent=11 // pred_fallthru
          _
        // Predicated region
        $region29: #{_lambda_.1} parent=11 // pred_check
          %p221 = pneg %p147
        $region30: #{_lambda_.1} parent=11 // pred_check_branch
          %223 = sbr.rel (%p221) target = $region32
        $region31: #{_lambda_.1} parent=11 // pred_region
          _
        $region32: #{_lambda_.1} parent=11 // pred_fallthru
          _
        // Predicated region
        $region33: #{_lambda_.1} parent=11 // pred_check
          %p224 = pneg %p168
        $region34: #{_lambda_.1} parent=11 // pred_check_branch
          %226 = sbr.rel (%p224) target = $region36
        $region35: #{_lambda_.1} parent=11 // pred_region
          _
        $region36: #{_lambda_.1} parent=11 // pred_fallthru
          _
      $region12: #{_lambda_.1} parent=5 // pred_fallthru
        _
      %p227 = scmp.lt.s32.totalorder %s16, 2
      // Predicated region
      $region37: #{_lambda_.1} parent=5 // pred_check
        %p228 = pneg %p227
      $region38: #{_lambda_.1} parent=5 // pred_check_branch
        %230 = sbr.rel (%p228) target = $region40
      $region39: #{_lambda_.1} parent=5 // pred_region
        // Predicated region
        $region41: #{_lambda_.1} parent=39 // pred_check
          %p231 = pneg %p36
        $region42: #{_lambda_.1} parent=39 // pred_check_branch
          %233 = sbr.rel (%p231) target = $region44
        $region43: #{_lambda_.1} parent=39 // pred_region
          %p234 = scmp.lt.s32.totalorder %s16, 1
          %s235 = scalar_select %p234, %s16, 1
          %s236 = smul.addr %s235, 8
          %s237 = smul.addr %s236, 8
          %s238 = scalar_lea.vmem %s0, %s237
        $region44: #{_lambda_.1} parent=39 // pred_fallthru
          _
      $region40: #{_lambda_.1} parent=5 // pred_fallthru
        _
      %p239 = scmp.le.s32.totalorder 1, %s16
      %p240 = scmp.lt.s32.totalorder %s16, 3
      %p241 = pnand %p239, %p240
      %p242 = pneg %p241
      // Predicated region
      $region45: #{_lambda_.1} parent=5 // pred_check
        _
      $region46: #{_lambda_.1} parent=5 // pred_check_branch
        %244 = sbr.rel (%p241) target = $region48
      $region47: #{_lambda_.1} parent=5 // pred_region
        %s245 = ssub.s32 %s16, 1
        %p246 = scmp.lt.s32.totalorder %s21, 1
        %s247 = scalar_select %p246, %s21, 1
        %s248 = smul.addr %s247, 8
        %s249 = smul.addr %s248, 8
        %s250 = scalar_lea.vmem %s0, %s249
        %p251 = pneg %p42
        %p252 = pneg %p39
        %p253 = pneg %p63
        %p254 = pneg %p60
        %p255 = pneg %p84
        %p256 = pneg %p81
        %p257 = pneg %p105
        %p258 = pneg %p102
        %p259 = pneg %p126
        %p260 = pneg %p123
        %p261 = pneg %p147
        %p262 = pneg %p144
        %p263 = pneg %p168
        %p264 = pneg %p165
        %p265 = pneg %p194
        %p266 = pneg %p191
        %s267 = sand.u32 %s181, 1
        %s268 = scalar_lea.sflag [#allocation3], %s267
        %s269 = sand.u32 %s181, 1
        %s270 = smul.addr %s269, 16
        %s271 = scalar_lea.vmem [#allocation2], %s270
        %p272 = scmp.lt.s32.totalorder %s21, 1
        %s273 = scalar_select %p272, %s21, 1
        %s274 = smul.addr %s273, 8
        %s275 = smul.addr %s274, 8
        %s276 = scalar_lea.vmem %s0, %s275
        %v277 = vld [vmem:[%s276] sm:$0xff]
        %v278 = vld [vmem:[%s276 + $0x8] sm:$0xff]
        %v279 = vld [vmem:[%s276 + $0x10] sm:$0xff]
        %v280 = vld [vmem:[%s276 + $0x18] sm:$0xff]
        %v281 = vld [vmem:[%s276 + $0x20] sm:$0xff]
        %v282 = vld [vmem:[%s276 + $0x28] sm:$0xff]
        %v283 = vld [vmem:[%s276 + $0x30] sm:$0xff]
        %v284 = vld [vmem:[%s276 + $0x38] sm:$0xff]
        %v285 = vld [vmem:[%s1] sm:$0xff]
        %v286 = vld [vmem:[%s1 + $0x8] sm:$0xff]
        %vm287 = vcmask 130048
        %v289 = vsel %vm287, %v277, 0
        %v292 = vsel %vm287, %v278, 0
        %v295 = vsel %vm287, %v279, 0
        %v298 = vsel %vm287, %v280, 0
        %v301 = vsel %vm287, %v281, 0
        %v304 = vsel %vm287, %v282, 0
        %v307 = vsel %vm287, %v283, 0
        %v310 = vsel %vm287, %v284, 0
        %312 = vmatprep.subr.mxu0 0.0
        %313 = vmatpush1.msra.mxu0 %v285
        %314 = vmatprep.subr.mxu0 0.0
        %315 = vmatpush1.msra.mxu0 %v286
        %316 = vmatprep.subr.mxu0 0.0
        %317 = vmatpush1.msra.mxu0 0.0
        %318 = vmatprep.subr.mxu0 0.0
        %319 = vmatpush1.msra.mxu0 0.0
        %320 = vmatprep.subr.mxu0 0.0
        %321 = vmatpush1.msra.mxu0 0.0
        %322 = vmatprep.subr.mxu0 0.0
        %323 = vmatpush1.msra.mxu0 0.0
        %324 = vmatprep.subr.mxu0 0.0
        %325 = vmatpush1.msra.mxu0 0.0
        %326 = vmatprep.subr.mxu0 0.0
        %327 = vmatpush1.msra.mxu0 0.0
        %328 = vmatprep.subr.mxu0 0.0
        %329 = vmatpush1.msra.mxu0 0.0
        %330 = vmatprep.subr.mxu0 0.0
        %331 = vmatpush1.msra.mxu0 0.0
        %332 = vmatprep.subr.mxu0 0.0
        %333 = vmatpush1.msra.mxu0 0.0
        %334 = vmatprep.subr.mxu0 0.0
        %335 = vmatpush1.msra.mxu0 0.0
        %336 = vmatprep.subr.mxu0 0.0
        %337 = vmatpush1.msra.mxu0 0.0
        %338 = vmatprep.subr.mxu0 0.0
        %339 = vmatpush1.msra.mxu0 0.0
        %340 = vmatprep.subr.mxu0 0.0
        %341 = vmatpush1.msra.mxu0 0.0
        %342 = vmatprep.subr.mxu0 0.0
        %343 = vmatpush1.msra.mxu0 0.0
        %344 = vmatprep.subr.mxu0 0.0
        %345 = vmatpush1.msra.mxu0 0.0
        %346 = vmatprep.subr.mxu0 0.0
        %347 = vmatpush1.msra.mxu0 0.0
        %348 = vmatprep.subr.mxu0 0.0
        %349 = vmatpush1.msra.mxu0 0.0
        %350 = vmatprep.subr.mxu0 0.0
        %351 = vmatpush1.msra.mxu0 0.0
        %352 = vmatprep.subr.mxu0 0.0
        %353 = vmatpush1.msra.mxu0 0.0
        %354 = vmatprep.subr.mxu0 0.0
        %355 = vmatpush1.msra.mxu0 0.0
        %356 = vmatprep.subr.mxu0 0.0
        %357 = vmatpush1.msra.mxu0 0.0
        %358 = vmatprep.subr.mxu0 0.0
        %359 = vmatpush1.msra.mxu0 0.0
        %360 = vmatprep.subr.mxu0 0.0
        %361 = vmatpush1.msra.mxu0 0.0
        %362 = vmatprep.subr.mxu0 0.0
        %363 = vmatpush1.msra.mxu0 0.0
        %364 = vmatprep.subr.mxu0 0.0
        %365 = vmatpush1.msra.mxu0 0.0
        %366 = vmatprep.subr.mxu0 0.0
        %367 = vmatpush1.msra.mxu0 0.0
        %368 = vmatprep.subr.mxu0 0.0
        %369 = vmatpush1.msra.mxu0 0.0
        %370 = vmatprep.subr.mxu0 0.0
        %371 = vmatpush1.msra.mxu0 0.0
        %372 = vmatprep.subr.mxu0 0.0
        %373 = vmatpush1.msra.mxu0 0.0
        %374 = vmatprep.subr.mxu0 0.0
        %375 = vmatpush1.msra.mxu0 0.0
        %376 = vmatprep.mubr.f32.mxu0 0.0
        %377 = vmatmul.mubr.f32.gmra.mrb[0].mxu0 %v289
        %v378 = vpop.f32.mrb[0].mxu0
        %v379 = vadd.f32 0.0, %v378
        %v380 = vpop.f32.mrb[0].mxu0
        %381 = vmatprep.mubr.f32.mxu0 0.0
        %382 = vmatmul.mubr.f32.gmra.mrb[0].mxu0 %v292
        %v383 = vpop.f32.mrb[0].mxu0
        %v384 = vadd.f32 0.0, %v383
        %v385 = vpop.f32.mrb[0].mxu0
        %386 = vmatprep.mubr.f32.mxu0 0.0
        %387 = vmatmul.mubr.f32.gmra.mrb[0].mxu0 %v295
        %v388 = vpop.f32.mrb[0].mxu0
        %v389 = vadd.f32 0.0, %v388
        %v390 = vpop.f32.mrb[0].mxu0
        %391 = vmatprep.mubr.f32.mxu0 0.0
        %392 = vmatmul.mubr.f32.gmra.mrb[0].mxu0 %v298
        %v393 = vpop.f32.mrb[0].mxu0
        %v394 = vadd.f32 0.0, %v393
        %v395 = vpop.f32.mrb[0].mxu0
        %396 = vmatprep.mubr.f32.mxu0 0.0
        %397 = vmatmul.mubr.f32.gmra.mrb[0].mxu0 %v301
        %v398 = vpop.f32.mrb[0].mxu0
        %v399 = vadd.f32 0.0, %v398
        %v400 = vpop.f32.mrb[0].mxu0
        %401 = vmatprep.mubr.f32.mxu0 0.0
        %402 = vmatmul.mubr.f32.gmra.mrb[0].mxu0 %v304
        %v403 = vpop.f32.mrb[0].mxu0
        %v404 = vadd.f32 0.0, %v403
        %v405 = vpop.f32.mrb[0].mxu0
        %406 = vmatprep.mubr.f32.mxu0 0.0
        %407 = vmatmul.mubr.f32.gmra.mrb[0].mxu0 %v307
        %v408 = vpop.f32.mrb[0].mxu0
        %v409 = vadd.f32 0.0, %v408
        %v410 = vpop.f32.mrb[0].mxu0
        %411 = vmatprep.mubr.f32.mxu0 0.0
        %412 = vmatmul.mubr.f32.gmra.mrb[0].mxu0 %v310
        %v413 = vpop.f32.mrb[0].mxu0
        %v414 = vadd.f32 0.0, %v413
        %v415 = vpop.f32.mrb[0].mxu0
        %416 = vdwg.mxu0
        %vm417 = vcmask 64512
        %v418 = vsel %vm417, %v379, -inf
        %v419 = vsel %vm417, %v389, -inf
        %v420 = vsel %vm417, %v399, -inf
        %v421 = vmax.f32 %v418, %v420
        %v422 = vsel %vm417, %v409, -inf
        %v423 = vmax.f32 %v419, %v422
        %v424 = vmax.f32 %v421, %v423
        %v425 = vsel %vm417, %v384, -inf
        %v426 = vsel %vm417, %v394, -inf
        %v427 = vsel %vm417, %v404, -inf
        %v428 = vmax.f32 %v425, %v427
        %v429 = vsel %vm417, %v414, -inf
        %v430 = vmax.f32 %v426, %v429
        %v431 = vmax.f32 %v428, %v430
        %v432 = vld [vmem:[%s2] sm:$0x1]
        %v434 = vlaneseq
        %v435 = vshrl.u32 %v434, 7
        %v436 = vsub.s32 0, %v435
        %v437 = vrot.slane %v432, %v436
        %v439 = vadd.f32 %v424, %v437
        %v440 = vadd.f32 %v431, %v437
        %v441 = vsel %vm417, %v439, -inf
        %v442 = vsel %vm417, %v440, -inf
        %v443 = vmax.f32 %v441, %v442
        %v444 = vrot.slane %v443, 4
        %v445 = vmax.f32 %v443, %v444
        %v446 = vrot.slane %v445, 2
        %v447 = vmax.f32 %v445, %v446
        %v448 = vrot.slane %v447, 1
        %v449 = vmax.f32 %v447, %v448
        %v450 = vsel %vm417, %v439, 0.0
        %v451 = vsel %vm417, %v440, 0.0
        %v452 = vadd.f32 %v450, %v451
        %v453 = vrot.slane %v452, 4
        %v454 = vadd.f32 %v452, %v453
        %v455 = vrot.slane %v454, 2
        %v456 = vadd.f32 %v454, %v455
        %v457 = vrot.slane %v456, 1
        %v458 = vadd.f32 %v456, %v457
        %v459 = vmul.f32 %v458, 0.0625
        %v460 = vld [vmem:[%s3] sm:$0xff]
        %v461 = vld [vmem:[%s4] sm:$0x1]
        %v463 = vsel %vm417, %v449, 0
        %465 = vmatprep.subr.mxu0 0.0
        %466 = vmatpush1.msra.mxu0 %v460
        %467 = vmatprep.subr.mxu0 0.0
        %468 = vmatpush1.msra.mxu0 0.0
        %469 = vmatprep.subr.mxu0 0.0
        %470 = vmatpush1.msra.mxu0 0.0
        %471 = vmatprep.subr.mxu0 0.0
        %472 = vmatpush1.msra.mxu0 0.0
        %473 = vmatprep.subr.mxu0 0.0
        %474 = vmatpush1.msra.mxu0 0.0
        %475 = vmatprep.subr.mxu0 0.0
        %476 = vmatpush1.msra.mxu0 0.0
        %477 = vmatprep.subr.mxu0 0.0
        %478 = vmatpush1.msra.mxu0 0.0
        %479 = vmatprep.subr.mxu0 0.0
        %480 = vmatpush1.msra.mxu0 0.0
        %481 = vmatprep.subr.mxu0 0.0
        %482 = vmatpush1.msra.mxu0 0.0
        %483 = vmatprep.subr.mxu0 0.0
        %484 = vmatpush1.msra.mxu0 0.0
        %485 = vmatprep.subr.mxu0 0.0
        %486 = vmatpush1.msra.mxu0 0.0
        %487 = vmatprep.subr.mxu0 0.0
        %488 = vmatpush1.msra.mxu0 0.0
        %489 = vmatprep.subr.mxu0 0.0
        %490 = vmatpush1.msra.mxu0 0.0
        %491 = vmatprep.subr.mxu0 0.0
        %492 = vmatpush1.msra.mxu0 0.0
        %493 = vmatprep.subr.mxu0 0.0
        %494 = vmatpush1.msra.mxu0 0.0
        %495 = vmatprep.subr.mxu0 0.0
        %496 = vmatpush1.msra.mxu0 0.0
        %497 = vmatprep.subr.mxu0 0.0
        %498 = vmatpush1.msra.mxu0 0.0
        %499 = vmatprep.subr.mxu0 0.0
        %500 = vmatpush1.msra.mxu0 0.0
        %501 = vmatprep.subr.mxu0 0.0
        %502 = vmatpush1.msra.mxu0 0.0
        %503 = vmatprep.subr.mxu0 0.0
        %504 = vmatpush1.msra.mxu0 0.0
        %505 = vmatprep.subr.mxu0 0.0
        %506 = vmatpush1.msra.mxu0 0.0
        %507 = vmatprep.subr.mxu0 0.0
        %508 = vmatpush1.msra.mxu0 0.0
        %509 = vmatprep.subr.mxu0 0.0
        %510 = vmatpush1.msra.mxu0 0.0
        %511 = vmatprep.subr.mxu0 0.0
        %512 = vmatpush1.msra.mxu0 0.0
        %513 = vmatprep.subr.mxu0 0.0
        %514 = vmatpush1.msra.mxu0 0.0
        %515 = vmatprep.subr.mxu0 0.0
        %516 = vmatpush1.msra.mxu0 0.0
        %517 = vmatprep.subr.mxu0 0.0
        %518 = vmatpush1.msra.mxu0 0.0
        %519 = vmatprep.subr.mxu0 0.0
        %520 = vmatpush1.msra.mxu0 0.0
        %521 = vmatprep.subr.mxu0 0.0
        %522 = vmatpush1.msra.mxu0 0.0
        %523 = vmatprep.subr.mxu0 0.0
        %524 = vmatpush1.msra.mxu0 0.0
        %525 = vmatprep.subr.mxu0 0.0
        %526 = vmatpush1.msra.mxu0 0.0
        %527 = vmatprep.subr.mxu0 0.0
        %528 = vmatpush1.msra.mxu0 0.0
        %529 = vmatprep.mubr.f32.mxu0 0.0
        %530 = vmatmul.mubr.f32.gmra.mrb[0].mxu0 %v463
        %v531 = vpop.f32.mrb[0].mxu0
        %v532 = vadd.f32 %v461, %v531
        %v533 = vpop.f32.mrb[0].mxu0
        %534 = vdwg.mxu0
        %v535 = vld [vmem:[%s5] sm:$0xff]
        %v537 = vsel %vm417, %v459, 0
        %539 = vmatprep.subr.mxu0 0.0
        %540 = vmatpush1.msra.mxu0 %v535
        %541 = vmatprep.subr.mxu0 0.0
        %542 = vmatpush1.msra.mxu0 0.0
        %543 = vmatprep.subr.mxu0 0.0
        %544 = vmatpush1.msra.mxu0 0.0
        %545 = vmatprep.subr.mxu0 0.0
        %546 = vmatpush1.msra.mxu0 0.0
        %547 = vmatprep.subr.mxu0 0.0
        %548 = vmatpush1.msra.mxu0 0.0
        %549 = vmatprep.subr.mxu0 0.0
        %550 = vmatpush1.msra.mxu0 0.0
        %551 = vmatprep.subr.mxu0 0.0
        %552 = vmatpush1.msra.mxu0 0.0
        %553 = vmatprep.subr.mxu0 0.0
        %554 = vmatpush1.msra.mxu0 0.0
        %555 = vmatprep.subr.mxu0 0.0
        %556 = vmatpush1.msra.mxu0 0.0
        %557 = vmatprep.subr.mxu0 0.0
        %558 = vmatpush1.msra.mxu0 0.0
        %559 = vmatprep.subr.mxu0 0.0
        %560 = vmatpush1.msra.mxu0 0.0
        %561 = vmatprep.subr.mxu0 0.0
        %562 = vmatpush1.msra.mxu0 0.0
        %563 = vmatprep.subr.mxu0 0.0
        %564 = vmatpush1.msra.mxu0 0.0
        %565 = vmatprep.subr.mxu0 0.0
        %566 = vmatpush1.msra.mxu0 0.0
        %567 = vmatprep.subr.mxu0 0.0
        %568 = vmatpush1.msra.mxu0 0.0
        %569 = vmatprep.subr.mxu0 0.0
        %570 = vmatpush1.msra.mxu0 0.0
        %571 = vmatprep.subr.mxu0 0.0
        %572 = vmatpush1.msra.mxu0 0.0
        %573 = vmatprep.subr.mxu0 0.0
        %574 = vmatpush1.msra.mxu0 0.0
        %575 = vmatprep.subr.mxu0 0.0
        %576 = vmatpush1.msra.mxu0 0.0
        %577 = vmatprep.subr.mxu0 0.0
        %578 = vmatpush1.msra.mxu0 0.0
        %579 = vmatprep.subr.mxu0 0.0
        %580 = vmatpush1.msra.mxu0 0.0
        %581 = vmatprep.subr.mxu0 0.0
        %582 = vmatpush1.msra.mxu0 0.0
        %583 = vmatprep.subr.mxu0 0.0
        %584 = vmatpush1.msra.mxu0 0.0
        %585 = vmatprep.subr.mxu0 0.0
        %586 = vmatpush1.msra.mxu0 0.0
        %587 = vmatprep.subr.mxu0 0.0
        %588 = vmatpush1.msra.mxu0 0.0
        %589 = vmatprep.subr.mxu0 0.0
        %590 = vmatpush1.msra.mxu0 0.0
        %591 = vmatprep.subr.mxu0 0.0
        %592 = vmatpush1.msra.mxu0 0.0
        %593 = vmatprep.subr.mxu0 0.0
        %594 = vmatpush1.msra.mxu0 0.0
        %595 = vmatprep.subr.mxu0 0.0
        %596 = vmatpush1.msra.mxu0 0.0
        %597 = vmatprep.subr.mxu0 0.0
        %598 = vmatpush1.msra.mxu0 0.0
        %599 = vmatprep.subr.mxu0 0.0
        %600 = vmatpush1.msra.mxu0 0.0
        %601 = vmatprep.subr.mxu0 0.0
        %602 = vmatpush1.msra.mxu0 0.0
        %603 = vmatprep.mubr.f32.mxu0 0.0
        %604 = vmatmul.mubr.f32.gmra.mrb[0].mxu0 %v537
        %v605 = vpop.f32.mrb[0].mxu0
        %v606 = vadd.f32 0.0, %v605
        %v607 = vpop.f32.mrb[0].mxu0
        %608 = vdwg.mxu0
        %v609 = vadd.f32 %v532, %v606
        %v610 = vld [vmem:[%s6] sm:$0x1]
        %v611 = vadd.f32 %v609, %v610
        %vm612 = vcmask 57344
        %v613 = vsel %vm612, %v611, -inf
        %614 = vmax.xlane.f32.xlu0 %v613
        %v615 = vpop.xlane.xlu0 %614
        %v616 = vsub.f32 %v611, %v615
        %v617 = vmul.f32 %v616, 1.442695
        %v618 = vpow.pop %v617
        %v619 = vsel %vm612, %v618, 0.0
        %620 = vadd.xlane.f32.xlu0 %v619
        %v621 = vpop.xlane.xlu0 %620
        %v622 = vrcp.pop %v621
        %v623 = vmul.f32 %v618, %v622
        %v624 = vlaneseq
        %v625 = vshrl.u32 %v624, 7
        %v626 = vsub.s32 0, %v625
        %v627 = vrot.slane %v623, %v626
        %v628 = vmul.f32 %v439, %v627
        %v629 = vmul.f32 %v440, %v627
        %630 = vst.msk [vmem:[%s271] sm:$0xff] %vm417, %v628
        %631 = vst.msk [vmem:[%s271 + $0x8] sm:$0xff] %vm417, %v629
        %s632 = sand.u32 %s181, 1
        %s633 = scalar_lea.sflag [#allocation3], %s632
        %s634 = sand.u32 %s181, 1
        %s635 = smul.addr %s634, 16
        %s636 = scalar_lea.vmem [#allocation2], %s635
        // Predicated region
        $region49: #{_lambda_.1} parent=47 // pred_check
          %p637 = pneg %p191
        $region50: #{_lambda_.1} parent=47 // pred_check_branch
          %639 = sbr.rel (%p637) target = $region52
        $region51: #{_lambda_.1} parent=47 // pred_region
          %s641 = ssub.s32 256, 256
          %642 = vsyncadd %s633, %s641
          %s643 = smul.addr %s21, 2
          %s644 = smul.addr %s643, 128
          %s645 = scalar_lea.hbm %s7, %s644
          %s646 = sshll.u32 %s636, 4
          %s647 = int_to_ptr.vmem [resolvable:$true] %s646
          %652 = dma.vmem_to_hbm [thread:$0]  %s647, 256, %s645, %s633, 128, 128, 8
        $region52: #{_lambda_.1} parent=47 // pred_fallthru
          _
      $region48: #{_lambda_.1} parent=5 // pred_fallthru
        _
      %p653 = scmp.le.s32.totalorder 2, %s16
      // Predicated region
      $region53: #{_lambda_.1} parent=5 // pred_check
        %p654 = pneg %p653
      $region54: #{_lambda_.1} parent=5 // pred_check_branch
        %656 = sbr.rel (%p654) target = $region56
      $region55: #{_lambda_.1} parent=5 // pred_region
        %s657 = ssub.s32 %s16, 2
        // Predicated region
        $region57: #{_lambda_.1} parent=55 // pred_check
          %p658 = pneg %p197
        $region58: #{_lambda_.1} parent=55 // pred_check_branch
          %660 = sbr.rel (%p658) target = $region60
        $region59: #{_lambda_.1} parent=55 // pred_region
          %s661 = sand.u32 %s182, 1
          %s662 = scalar_lea.sflag [#allocation3], %s661
          %s663 = sand.u32 %s182, 1
          %s664 = smul.addr %s663, 16
          %s665 = scalar_lea.vmem [#allocation2], %s664
          %666 = dma.done %s662, 256
        $region60: #{_lambda_.1} parent=55 // pred_fallthru
          _
      $region56: #{_lambda_.1} parent=5 // pred_fallthru
        _
    $region6: #{_lambda_.1} parent=1 // loop_footer
      %s20 = sadd.s32 1, %s16
    $region7: #{_lambda_.1} parent=1 // loop_footer_branch
      %15 = sbr.rel target = $region3
    $region8: #{_lambda_.1} parent=1 // loop_exit
      _
    %667 = vsyncpa [#allocation3], 1
    %s668 = scalar_lea.sflag [#allocation3], 1
    %669 = vsyncpa %s668, 1

</llo_original>
